<compile_context>
chip_gen: v6e
topology: v6e:2x2x1
jax: 0.10.0
libtpu: 0.0.40
codegen_flags: <defaults>
</compile_context>

<pallas_src>
import functools

import jax
import jax.numpy as jnp
from jax.experimental import pallas as pl
from jax.experimental.pallas import tpu as pltpu

LANE = 128        # pad hidden / a_dim to one full lane width only (no more)
SUBLANE = 8       # batch rows padded to a sublane multiple
NEG_INF = -1e30   # bias for padded logit lanes -> exp underflows to exactly 0

MAX_TB = 1024                         # max batch-tile rows (512-1024 sweet spot)
_TILE_VMEM_BUDGET = 8 << 20           # VMEM budget used to cap tb
_WEIGHT_SINGLE_BUFFER_BYTES = 4 << 20  # single-buffer weights past this size


def _round_up(x, m):
    return (x + m - 1) // m * m


def _cdiv(a, b):
    return -(-a // b)


def _leaky_relu(x, slope=0.01):   # PyTorch nn.LeakyReLU default slope
    return jnp.where(x > 0, x, slope * x)


def actor_kernel(x_ref, w1_ref, b1_ref, w2_ref, b2_ref, w3_ref, b3_ref, o_ref):
    x = x_ref[...]

    # fc1 + LeakyReLU  (bf16 weights, if used, are upcast in-vreg; MXU acc f32)
    h = jnp.dot(x, w1_ref[...], preferred_element_type=jnp.float32) + b1_ref[...]
    h = _leaky_relu(h)

    # fc2 + LeakyReLU
    h = jnp.dot(h, w2_ref[...], preferred_element_type=jnp.float32) + b2_ref[...]
    h = _leaky_relu(h)

    # fc3 (padded logit lanes carry a -1e30 bias -> softmax weight exactly 0)
    logits = jnp.dot(h, w3_ref[...], preferred_element_type=jnp.float32) + b3_ref[...]

    # Row-wise softmax (PyTorch nn.Softmax() on 2D input -> dim=1)
    m = jnp.max(logits, axis=-1, keepdims=True)
    e = jnp.exp(logits - m)
    s = jnp.sum(e, axis=-1, keepdims=True)
    inv = pl.reciprocal(s, approx=True)   # EUP vrcp (free slot)
    inv = inv * (2.0 - s * inv)           # one Newton step -> ~f32 accuracy
    o_ref[...] = (e * inv).astype(o_ref.dtype)


def prepare_actor_params(params, weight_dtype=jnp.float32):
    """One-time prep: transpose to [in, out], pad hidden/a_dim to 128 lanes.

    weight_dtype=jnp.bfloat16 halves weight DMA / VMEM residency (v6e/v7x);
    biases stay f32 (tiny, and keeps the -1e30 pad trick exact)."""
    w1, b1 = params["w1"], params["b1"]   # w1: [H, S], b1: [H]
    w2, b2 = params["w2"], params["b2"]   # w2: [H, H], b2: [H]
    w3, b3 = params["w3"], params["b3"]   # w3: [A, H], b3: [A]
    H, S = w1.shape
    A = w3.shape[0]
    Hp = _round_up(max(H, LANE), LANE)
    Ap = _round_up(max(A, LANE), LANE)

    w1p = jnp.zeros((S, Hp), jnp.float32).at[:, :H].set(w1.T).astype(weight_dtype)
    b1p = jnp.zeros((1, Hp), jnp.float32).at[:, :H].set(b1[None, :])
    w2p = jnp.zeros((Hp, Hp), jnp.float32).at[:H, :H].set(w2.T).astype(weight_dtype)
    b2p = jnp.zeros((1, Hp), jnp.float32).at[:, :H].set(b2[None, :])
    w3p = jnp.zeros((Hp, Ap), jnp.float32).at[:H, :A].set(w3.T).astype(weight_dtype)
    b3p = jnp.full((1, Ap), NEG_INF, jnp.float32).at[:, :A].set(b3[None, :])
    return {"w1": w1p, "b1": b1p, "w2": w2p, "b2": b2p, "w3": w3p, "b3": b3p}


@functools.partial(jax.jit, static_argnames=("a_dim", "out_dtype"))
def actor_forward(x, prep, a_dim, out_dtype=jnp.float32):
    """x: [B, s_dim] float32.  prep: output of prepare_actor_params."""
    B, S = x.shape
    Hp = prep["w1"].shape[1]
    Ap = prep["w3"].shape[1]
    w_bytes = sum(prep[k].size * prep[k].dtype.itemsize for k in ("w1", "w2", "w3"))
    b_bytes = sum(prep[k].size * prep[k].dtype.itemsize for k in ("b1", "b2", "b3"))

    # ---- Batch tiling -----------------------------------------------------
    # Large tiles (up to 1024 rows, VMEM-capped), grid >= 2 when the batch is
    # big enough (v7x megacore), and tb derived from B so padding is at most a
    # few sublanes instead of up to a whole tile.
    bytes_per_row = 4 * (S + Ap + 4 * Hp)   # x/out tiles + f32 intermediates
    tb_cap = max(SUBLANE,
                 min(MAX_TB,
                     _TILE_VMEM_BUDGET // max(bytes_per_row, 1) // SUBLANE * SUBLANE))
    B8 = _round_up(max(B, SUBLANE), SUBLANE)
    n_tiles = 1 if B8 <= 2 * SUBLANE else max(2, _cdiv(B8, tb_cap))
    tb = _round_up(_cdiv(B8, n_tiles), SUBLANE)
    Bp = tb * n_tiles
    if Bp != B:
        x = jnp.pad(x, ((0, Bp - B), (0, 0)))

    # ---- Weight specs: constant index_map, optionally single-buffered ------
    # Nothing to pipeline for grid-invariant operands; single-buffering halves
    # their VMEM residency once the weights are big enough to matter.
    w_kwargs = (dict(pipeline_mode=pl.Buffered(1))
                if w_bytes >= _WEIGHT_SINGLE_BUFFER_BYTES else {})

    def wspec(shape):
        return pl.BlockSpec(shape, lambda i: (0, 0), **w_kwargs)

    # ---- Explicit VMEM budget ----------------------------------------------
    wbuf = 1 if w_kwargs else 2
    out_itemsize = jnp.dtype(out_dtype).itemsize
    vmem_est = (2 * tb * S * 4 + 2 * tb * Ap * out_itemsize   # pipelined x/out
                + wbuf * (w_bytes + b_bytes)                  # resident weights
                + 4 * tb * Hp * 4)                            # f32 intermediates
    vmem_limit = int(min(64 << 20, max(2 * vmem_est, 16 << 20)))

    flops = 2 * Bp * (S * Hp + Hp * Hp + Hp * Ap) + 4 * Bp * Hp
    transcendentals = Bp * Ap + Bp
    bytes_accessed = 4 * Bp * S + w_bytes + b_bytes + out_itemsize * Bp * Ap

    out_pad = pl.pallas_call(
        actor_kernel,
        out_shape=jax.ShapeDtypeStruct((Bp, Ap), out_dtype),
        grid=(n_tiles,),
        in_specs=[
            pl.BlockSpec((tb, S), lambda i: (i, 0)),   # x tile
            wspec((S, Hp)),                            # w1
            wspec((1, Hp)),                            # b1
            wspec((Hp, Hp)),                           # w2
            wspec((1, Hp)),                            # b2
            wspec((Hp, Ap)),                           # w3
            wspec((1, Ap)),                            # b3
        ],
        out_specs=pl.BlockSpec((tb, Ap), lambda i: (i, 0)),
        compiler_params=pltpu.CompilerParams(
            dimension_semantics=("parallel",),
            vmem_limit_bytes=vmem_limit),
        cost_estimate=pl.CostEstimate(
            flops=flops,
            transcendentals=transcendentals,
            bytes_accessed=bytes_accessed),
    )(x, prep["w1"], prep["b1"], prep["w2"], prep["b2"], prep["w3"], prep["b3"])

    return out_pad[:B, :a_dim]


def init_actor_params(key, s_dim, hidden_size, a_dim):
    """Matches the PyTorch module init: weights ~ N(0, 0.1),
    biases keep nn.Linear default U(-1/sqrt(fan_in), 1/sqrt(fan_in))."""
    ks = jax.random.split(key, 6)

    def bias(k, fan_in, n):
        bound = 1.0 / jnp.sqrt(jnp.float32(fan_in))
        return jax.random.uniform(k, (n,), jnp.float32, -bound, bound)

    return {
        "w1": 0.1 * jax.random.normal(ks[0], (hidden_size, s_dim), jnp.float32),
        "b1": bias(ks[1], s_dim, hidden_size),
        "w2": 0.1 * jax.random.normal(ks[2], (hidden_size, hidden_size), jnp.float32),
        "b2": bias(ks[3], hidden_size, hidden_size),
        "w3": 0.1 * jax.random.normal(ks[4], (a_dim, hidden_size), jnp.float32),
        "b3": bias(ks[5], hidden_size, a_dim),
    }


def actor_ref(x, params):
    """Pure-JAX reference (unpadded, PyTorch-convention weights)."""
    h = x @ params["w1"].T + params["b1"]
    h = jnp.where(h > 0, h, 0.01 * h)
    h = h @ params["w2"].T + params["b2"]
    h = jnp.where(h > 0, h, 0.01 * h)
    logits = h @ params["w3"].T + params["b3"]
    return jax.nn.softmax(logits, axis=-1)


if __name__ == "__main__":
    s_dim, hidden_size, a_dim = 16, 32, 8
    batch = 8

    key = jax.random.PRNGKey(0)
    kx, kp = jax.random.split(key)
    x = jax.random.normal(kx, (batch, s_dim), jnp.float32)
    params = init_actor_params(kp, s_dim, hidden_size, a_dim)

    # One-time weight prep (transpose + lane pad) -- not in the per-call path.
    prep = prepare_actor_params(params)                     # f32 accuracy path
    ref = actor_ref(x, params)

    out = jax.block_until_ready(actor_forward(x, prep, a_dim))
    assert out.shape == (batch, a_dim)
    assert jnp.allclose(out, ref, atol=1e-5, rtol=1e-5), "mismatch vs reference"
    assert jnp.allclose(jnp.sum(out, axis=-1), 1.0, atol=1e-5), "rows must sum to 1"

    # Batch-padding path (B not a multiple of 8).
    x_odd = x[:5]
    out_odd = jax.block_until_ready(actor_forward(x_odd, prep, a_dim))
    assert out_odd.shape == (5, a_dim)
    assert jnp.allclose(out_odd, actor_ref(x_odd, params), atol=1e-5, rtol=1e-5)

    # Larger batch: exercises the multi-tile (grid >= 2) path + minimal padding
    # (B=600 -> two 304-row tiles, 8 pad rows, instead of padding to 2x256+256).
    x_big = jax.random.normal(jax.random.PRNGKey(1), (600, s_dim), jnp.float32)
    out_big = jax.block_until_ready(actor_forward(x_big, prep, a_dim))
    assert out_big.shape == (600, a_dim)
    assert jnp.allclose(out_big, actor_ref(x_big, params), atol=1e-5, rtol=1e-5)

    # Production path: bf16 weights + bf16 output (half the weight DMA and half
    # the dominant HBM writeback).  Looser tolerance due to bf16 quantization.
    prep_bf16 = prepare_actor_params(params, weight_dtype=jnp.bfloat16)
    out_bf16 = jax.block_until_ready(
        actor_forward(x, prep_bf16, a_dim, out_dtype=jnp.bfloat16))
    assert out_bf16.shape == (batch, a_dim)
    assert jnp.allclose(out_bf16.astype(jnp.float32), ref, atol=5e-2)
    assert jnp.allclose(jnp.sum(out_bf16.astype(jnp.float32), axis=-1), 1.0, atol=1e-2)

    print("KERNEL_OK")
</pallas_src>

<mosaic_0001>
module attributes {stable_mosaic.version = 11 : i64} {
  func.func @actor_kernel(%arg0: i32, %arg1: memref<8x16xf32, #tpu.memory_space<vmem>>, %arg2: memref<16x128xf32, #tpu.memory_space<vmem>>, %arg3: memref<1x128xf32, #tpu.memory_space<vmem>>, %arg4: memref<128x128xf32, #tpu.memory_space<vmem>>, %arg5: memref<1x128xf32, #tpu.memory_space<vmem>>, %arg6: memref<128x128xf32, #tpu.memory_space<vmem>>, %arg7: memref<1x128xf32, #tpu.memory_space<vmem>>, %arg8: memref<8x128xf32, #tpu.memory_space<vmem>>) attributes {dimension_semantics = [#tpu.dimension_semantics<parallel>], iteration_bounds = array<i64: 1>, scalar_prefetch = 0 : i64, scratch_operands = 0 : i64, tpu.core_type = #tpu.core_type<tc>, window_params = [{transform_indices = @transform_0, window_bounds = array<i64: 8, 16>}, {pipeline_mode = #tpu.pipeline_mode<synchronous>, transform_indices = @transform_1, window_bounds = array<i64: 16, 128>}, {pipeline_mode = #tpu.pipeline_mode<synchronous>, transform_indices = @transform_2, window_bounds = array<i64: 1, 128>}, {pipeline_mode = #tpu.pipeline_mode<synchronous>, transform_indices = @transform_3, window_bounds = array<i64: 128, 128>}, {pipeline_mode = #tpu.pipeline_mode<synchronous>, transform_indices = @transform_4, window_bounds = array<i64: 1, 128>}, {pipeline_mode = #tpu.pipeline_mode<synchronous>, transform_indices = @transform_5, window_bounds = array<i64: 128, 128>}, {pipeline_mode = #tpu.pipeline_mode<synchronous>, transform_indices = @transform_6, window_bounds = array<i64: 1, 128>}, {transform_indices = @transform_7, window_bounds = array<i64: 8, 128>}]} {
    %c0 = arith.constant 0 : index
    %c0_0 = arith.constant 0 : index
    %0 = vector.load %arg1[%c0, %c0_0] : memref<8x16xf32, #tpu.memory_space<vmem>>, vector<8x16xf32>
    %c0_1 = arith.constant 0 : index
    %c0_2 = arith.constant 0 : index
    %1 = vector.load %arg2[%c0_1, %c0_2] : memref<16x128xf32, #tpu.memory_space<vmem>>, vector<16x128xf32>
    %cst = arith.constant dense<0.000000e+00> : vector<8x128xf32>
    %2 = tpu.matmul %0, %1, %cst {dimension_numbers = #tpu.dot_dimension_numbers<[1], [0], [0], [1], [0, 0, 1, 1], [], []>} : vector<8x16xf32>, vector<16x128xf32>, vector<8x128xf32> -> vector<8x128xf32>
    %c0_3 = arith.constant 0 : index
    %c0_4 = arith.constant 0 : index
    %3 = vector.load %arg3[%c0_3, %c0_4] : memref<1x128xf32, #tpu.memory_space<vmem>>, vector<1x128xf32>
    %4 = vector.broadcast %3 : vector<1x128xf32> to vector<8x128xf32>
    %5 = arith.addf %2, %4 : vector<8x128xf32>
    %cst_5 = arith.constant 0.000000e+00 : f32
    %6 = vector.broadcast %cst_5 : f32 to vector<8x128xf32>
    %7 = arith.cmpf ogt, %5, %6 : vector<8x128xf32>
    %cst_6 = arith.constant 0.00999999977 : f32
    %8 = vector.broadcast %cst_6 : f32 to vector<8x128xf32>
    %9 = arith.mulf %8, %5 : vector<8x128xf32>
    %10 = arith.select %7, %5, %9 : vector<8x128xi1>, vector<8x128xf32>
    %c0_7 = arith.constant 0 : index
    %c0_8 = arith.constant 0 : index
    %11 = vector.load %arg4[%c0_7, %c0_8] : memref<128x128xf32, #tpu.memory_space<vmem>>, vector<128x128xf32>
    %cst_9 = arith.constant dense<0.000000e+00> : vector<8x128xf32>
    %12 = tpu.matmul %10, %11, %cst_9 {dimension_numbers = #tpu.dot_dimension_numbers<[1], [0], [0], [1], [0, 0, 1, 1], [], []>} : vector<8x128xf32>, vector<128x128xf32>, vector<8x128xf32> -> vector<8x128xf32>
    %c0_10 = arith.constant 0 : index
    %c0_11 = arith.constant 0 : index
    %13 = vector.load %arg5[%c0_10, %c0_11] : memref<1x128xf32, #tpu.memory_space<vmem>>, vector<1x128xf32>
    %14 = vector.broadcast %13 : vector<1x128xf32> to vector<8x128xf32>
    %15 = arith.addf %12, %14 : vector<8x128xf32>
    %cst_12 = arith.constant 0.000000e+00 : f32
    %16 = vector.broadcast %cst_12 : f32 to vector<8x128xf32>
    %17 = arith.cmpf ogt, %15, %16 : vector<8x128xf32>
    %cst_13 = arith.constant 0.00999999977 : f32
    %18 = vector.broadcast %cst_13 : f32 to vector<8x128xf32>
    %19 = arith.mulf %18, %15 : vector<8x128xf32>
    %20 = arith.select %17, %15, %19 : vector<8x128xi1>, vector<8x128xf32>
    %c0_14 = arith.constant 0 : index
    %c0_15 = arith.constant 0 : index
    %21 = vector.load %arg6[%c0_14, %c0_15] : memref<128x128xf32, #tpu.memory_space<vmem>>, vector<128x128xf32>
    %cst_16 = arith.constant dense<0.000000e+00> : vector<8x128xf32>
    %22 = tpu.matmul %20, %21, %cst_16 {dimension_numbers = #tpu.dot_dimension_numbers<[1], [0], [0], [1], [0, 0, 1, 1], [], []>} : vector<8x128xf32>, vector<128x128xf32>, vector<8x128xf32> -> vector<8x128xf32>
    %c0_17 = arith.constant 0 : index
    %c0_18 = arith.constant 0 : index
    %23 = vector.load %arg7[%c0_17, %c0_18] : memref<1x128xf32, #tpu.memory_space<vmem>>, vector<1x128xf32>
    %24 = vector.broadcast %23 : vector<1x128xf32> to vector<8x128xf32>
    %25 = arith.addf %22, %24 : vector<8x128xf32>
    %cst_19 = arith.constant dense<0xFF800000> : vector<8xf32>
    %26 = vector.multi_reduction <maximumf>, %25, %cst_19 [1] : vector<8x128xf32> to vector<8xf32>
    %27 = vector.shape_cast %26 : vector<8xf32> to vector<8x1xf32>
    %28 = vector.broadcast %27 : vector<8x1xf32> to vector<8x128xf32>
    %29 = arith.subf %25, %28 : vector<8x128xf32>
    %30 = math.exp %29 : vector<8x128xf32>
    %cst_20 = arith.constant dense<0.000000e+00> : vector<8xf32>
    %31 = vector.multi_reduction <add>, %30, %cst_20 [1] : vector<8x128xf32> to vector<8xf32>
    %32 = vector.shape_cast %31 : vector<8xf32> to vector<8x1xf32>
    %33 = tpu.reciprocal %32 {approx = true} : vector<8x1xf32> -> vector<8x1xf32>
    %34 = arith.mulf %32, %33 : vector<8x1xf32>
    %cst_21 = arith.constant 2.000000e+00 : f32
    %35 = vector.broadcast %cst_21 : f32 to vector<8x1xf32>
    %36 = arith.subf %35, %34 : vector<8x1xf32>
    %37 = arith.mulf %33, %36 : vector<8x1xf32>
    %38 = vector.broadcast %37 : vector<8x1xf32> to vector<8x128xf32>
    %39 = arith.mulf %30, %38 : vector<8x128xf32>
    %c0_22 = arith.constant 0 : index
    %c0_23 = arith.constant 0 : index
    %40 = vector.load %arg8[%c0_22, %c0_23] : memref<8x128xf32, #tpu.memory_space<vmem>>, vector<8x128xf32>
    tpu.vector_store %arg8[%c0_22, %c0_23], %39 {strides = array<i32>} : memref<8x128xf32, #tpu.memory_space<vmem>>, vector<8x128xf32>,
    return
  }
  func.func @transform_0(%arg0: i32) -> (i32, i32) {
    %c0_i32 = arith.constant 0 : i32
    %c0_i32_0 = arith.constant 0 : i32
    return %arg0, %c0_i32 : i32, i32
  }
  func.func @transform_1(%arg0: i32) -> (i32, i32) {
    %c0_i32 = arith.constant 0 : i32
    %c0_i32_0 = arith.constant 0 : i32
    %c0_i32_1 = arith.constant 0 : i32
    return %c0_i32, %c0_i32_0 : i32, i32
  }
  func.func @transform_2(%arg0: i32) -> (i32, i32) {
    %c0_i32 = arith.constant 0 : i32
    %c0_i32_0 = arith.constant 0 : i32
    %c0_i32_1 = arith.constant 0 : i32
    return %c0_i32, %c0_i32_0 : i32, i32
  }
  func.func @transform_3(%arg0: i32) -> (i32, i32) {
    %c0_i32 = arith.constant 0 : i32
    %c0_i32_0 = arith.constant 0 : i32
    %c0_i32_1 = arith.constant 0 : i32
    return %c0_i32, %c0_i32_0 : i32, i32
  }
  func.func @transform_4(%arg0: i32) -> (i32, i32) {
    %c0_i32 = arith.constant 0 : i32
    %c0_i32_0 = arith.constant 0 : i32
    %c0_i32_1 = arith.constant 0 : i32
    return %c0_i32, %c0_i32_0 : i32, i32
  }
  func.func @transform_5(%arg0: i32) -> (i32, i32) {
    %c0_i32 = arith.constant 0 : i32
    %c0_i32_0 = arith.constant 0 : i32
    %c0_i32_1 = arith.constant 0 : i32
    return %c0_i32, %c0_i32_0 : i32, i32
  }
  func.func @transform_6(%arg0: i32) -> (i32, i32) {
    %c0_i32 = arith.constant 0 : i32
    %c0_i32_0 = arith.constant 0 : i32
    %c0_i32_1 = arith.constant 0 : i32
    return %c0_i32, %c0_i32_0 : i32, i32
  }
  func.func @transform_7(%arg0: i32) -> (i32, i32) {
    %c0_i32 = arith.constant 0 : i32
    %c0_i32_0 = arith.constant 0 : i32
    return %arg0, %c0_i32 : i32, i32
  }
}

</mosaic_0001>

<llo_original>
// kernel: actor_forward.1
$region0: #{actor_forward.1}
  #allocation0 [shape = 'u32[]', space=smem, size = 0x4, offset = 0x4, fixed_abs, tag = 'smem constant byte address 0x4 - core index']
  #allocation1 [shape = 'u32[144,128]{1,0:T(1,128)}', space=vmem, size = 0x12000, scoped, tag = 'internal scratch']
  %s0 = inlined_call_operand.hbm [shape: f32[8,16], index: 0, kind: input, shape index: {}]
  %s1 = inlined_call_operand.hbm [shape: f32[16,128], index: 1, kind: input, shape index: {}]
  %s2 = inlined_call_operand.vmem [shape: f32[1,128], index: 2, kind: input, shape index: {}]
  %s3 = inlined_call_operand.hbm [shape: f32[128,128], index: 3, kind: input, shape index: {}]
  %s4 = inlined_call_operand.vmem [shape: f32[1,128], index: 4, kind: input, shape index: {}]
  %s5 = inlined_call_operand.hbm [shape: f32[128,128], index: 5, kind: input, shape index: {}]
  %s6 = inlined_call_operand.vmem [shape: f32[1,128], index: 6, kind: input, shape index: {}]
  %s7 = inlined_call_operand.hbm [shape: f32[8,128], index: 7, kind: output, shape index: {}]
  %s8 = sld [smem:[#allocation0]]
  $region54: #{actor_forward.1} parent=0
    _
  %s10 = ssub.s32 1, %s8
  %s11 = scalar_select 0, %s10, %s8
  $region1: #{actor_forward.1} parent=0
    #allocation2 [shape = 'u8[4096]{0}', space=vmem, size = 0x1000, scoped, tag = 'input window, operand 0, single buffered']
    #allocation3 [shape = 's32[1]{0}', space=sflag, size = 0x4, scoped, tag = 'scoped memory for actor_forward.1']
    #allocation4 [shape = 's32[1]{0}', space=sflag, size = 0x4, scoped, tag = 'scoped memory for actor_forward.1']
    #allocation5 [shape = 'u8[8192]{0}', space=vmem, size = 0x2000, scoped, tag = 'input window, operand 1, single buffered']
    #allocation6 [shape = 's32[1]{0}', space=sflag, size = 0x4, scoped, tag = 'scoped memory for actor_forward.1']
    #allocation7 [shape = 'u8[65536]{0}', space=vmem, size = 0x10000, scoped, tag = 'input window, operand 3, single buffered']
    #allocation8 [shape = 'u8[65536]{0}', space=vmem, size = 0x10000, scoped, tag = 'input window, operand 5, single buffered']
    #allocation9 [shape = 's32[1]{0}', space=sflag, size = 0x4, scoped, tag = 'scoped memory for actor_forward.1']
    #allocation10 [shape = 'u8[4096]{0}', space=vmem, size = 0x1000, scoped, tag = 'output window, operand 0, single buffered']
    %12 = vsyncpa [#allocation3], 0
    %13 = vsyncpa [#allocation6], 0
    %14 = vsyncpa [#allocation9], 0
    %15 = vsyncpa [#allocation4], 0
    // Predicated region
    $region2: #{actor_forward.1} parent=1 // pred_check
      _
    $region3: #{actor_forward.1} parent=1 // pred_check_branch
      %17 = sbr.rel (0) target = $region5
    $region4: #{actor_forward.1} parent=1 // pred_region
      %s19 = ssub.s32 128, 128
      %20 = vsyncadd [#allocation3], %s19
      %s22 = sshll.u32 [#allocation2], 4
      %s23 = int_to_ptr.vmem [resolvable:$true] %s22
      %25 = dma.hbm_to_vmem [thread:$0]  %s0, 128, %s23, [#allocation3]
    $region5: #{actor_forward.1} parent=1 // pred_fallthru
      _
    // Predicated region
    $region6: #{actor_forward.1} parent=1 // pred_check
      _
    $region7: #{actor_forward.1} parent=1 // pred_check_branch
      %27 = sbr.rel (0) target = $region9
    $region8: #{actor_forward.1} parent=1 // pred_region
      %s29 = ssub.s32 256, 256
      %30 = vsyncadd [#allocation6], %s29
      %s31 = sshll.u32 [#allocation5], 4
      %s32 = int_to_ptr.vmem [resolvable:$true] %s31
      %37 = dma.hbm_to_vmem [thread:$0]  %s1, 256, %s32, [#allocation6], 128, 128, 8
    $region9: #{actor_forward.1} parent=1 // pred_fallthru
      _
    // Predicated region
    $region10: #{actor_forward.1} parent=1 // pred_check
      _
    $region11: #{actor_forward.1} parent=1 // pred_check_branch
      %39 = sbr.rel (0) target = $region13
    $region12: #{actor_forward.1} parent=1 // pred_region
      _
    $region13: #{actor_forward.1} parent=1 // pred_fallthru
      _
    // Predicated region
    $region14: #{actor_forward.1} parent=1 // pred_check
      _
    $region15: #{actor_forward.1} parent=1 // pred_check_branch
      %41 = sbr.rel (0) target = $region17
    $region16: #{actor_forward.1} parent=1 // pred_region
      %s43 = ssub.s32 2048, 2048
      %44 = vsyncadd [#allocation6], %s43
      %s45 = sshll.u32 [#allocation7], 4
      %s46 = int_to_ptr.vmem [resolvable:$true] %s45
      %51 = dma.hbm_to_vmem [thread:$0]  %s3, 2048, %s46, [#allocation6], 128, 128, 8
    $region17: #{actor_forward.1} parent=1 // pred_fallthru
      _
    // Predicated region
    $region18: #{actor_forward.1} parent=1 // pred_check
      _
    $region19: #{actor_forward.1} parent=1 // pred_check_branch
      %53 = sbr.rel (0) target = $region21
    $region20: #{actor_forward.1} parent=1 // pred_region
      _
    $region21: #{actor_forward.1} parent=1 // pred_fallthru
      _
    // Predicated region
    $region22: #{actor_forward.1} parent=1 // pred_check
      _
    $region23: #{actor_forward.1} parent=1 // pred_check_branch
      %55 = sbr.rel (0) target = $region25
    $region24: #{actor_forward.1} parent=1 // pred_region
      %s57 = ssub.s32 2048, 2048
      %58 = vsyncadd [#allocation9], %s57
      %s59 = sshll.u32 [#allocation8], 4
      %s60 = int_to_ptr.vmem [resolvable:$true] %s59
      %65 = dma.hbm_to_vmem [thread:$0]  %s5, 2048, %s60, [#allocation9], 128, 128, 8
    $region25: #{actor_forward.1} parent=1 // pred_fallthru
      _
    // Predicated region
    $region26: #{actor_forward.1} parent=1 // pred_check
      _
    $region27: #{actor_forward.1} parent=1 // pred_check_branch
      %67 = sbr.rel (0) target = $region29
    $region28: #{actor_forward.1} parent=1 // pred_region
      _
    $region29: #{actor_forward.1} parent=1 // pred_fallthru
      _
    // Predicated region
    $region30: #{actor_forward.1} parent=1 // pred_check
      _
    $region31: #{actor_forward.1} parent=1 // pred_check_branch
      %69 = sbr.rel (0) target = $region33
    $region32: #{actor_forward.1} parent=1 // pred_region
      %70 = dma.done [#allocation3], 128
    $region33: #{actor_forward.1} parent=1 // pred_fallthru
      _
    // Predicated region
    $region34: #{actor_forward.1} parent=1 // pred_check
      _
    $region35: #{actor_forward.1} parent=1 // pred_check_branch
      %72 = sbr.rel (0) target = $region37
    $region36: #{actor_forward.1} parent=1 // pred_region
      %73 = dma.done [#allocation6], 256
    $region37: #{actor_forward.1} parent=1 // pred_fallthru
      _
    // Predicated region
    $region38: #{actor_forward.1} parent=1 // pred_check
      _
    $region39: #{actor_forward.1} parent=1 // pred_check_branch
      %75 = sbr.rel (0) target = $region41
    $region40: #{actor_forward.1} parent=1 // pred_region
      %76 = dma.done [#allocation6], 2048
    $region41: #{actor_forward.1} parent=1 // pred_fallthru
      _
    // Predicated region
    $region42: #{actor_forward.1} parent=1 // pred_check
      _
    $region43: #{actor_forward.1} parent=1 // pred_check_branch
      %78 = sbr.rel (0) target = $region45
    $region44: #{actor_forward.1} parent=1 // pred_region
      %79 = dma.done [#allocation9], 2048
    $region45: #{actor_forward.1} parent=1 // pred_fallthru
      _
    %v80 = vld [vmem:[#allocation2] sm:$0xff]
    %v81 = vld [vmem:[#allocation5] sm:$0xff]
    %v82 = vld [vmem:[#allocation5 + $0x8] sm:$0xff]
    %v83 = vld [vmem:[%s2] sm:$0x1]
    %v85 = vlaneseq
    %v86 = vshrl.u32 %v85, 7
    %v87 = vsub.s32 0, %v86
    %v88 = vrot.slane %v83, %v87
    %vm90 = vcmask 130048
    %v92 = vsel %vm90, %v80, 0
    %94 = vmatprep.subr.mxu0 0.0
    %95 = vmatpush1.msra.mxu0 0.0
    %96 = vmatprep.subr.mxu0 0.0
    %97 = vmatpush1.msra.mxu0 0.0
    %98 = vmatprep.subr.mxu0 0.0
    %99 = vmatpush1.msra.mxu0 0.0
    %100 = vmatprep.subr.mxu0 0.0
    %101 = vmatpush1.msra.mxu0 0.0
    %102 = vmatprep.subr.mxu0 0.0
    %103 = vmatpush1.msra.mxu0 0.0
    %104 = vmatprep.subr.mxu0 0.0
    %105 = vmatpush1.msra.mxu0 0.0
    %106 = vmatprep.subr.mxu0 0.0
    %107 = vmatpush1.msra.mxu0 0.0
    %108 = vmatprep.subr.mxu0 0.0
    %109 = vmatpush1.msra.mxu0 0.0
    %110 = vmatprep.subr.mxu0 0.0
    %111 = vmatpush1.msra.mxu0 0.0
    %112 = vmatprep.subr.mxu0 0.0
    %113 = vmatpush1.msra.mxu0 0.0
    %114 = vmatprep.subr.mxu0 0.0
    %115 = vmatpush1.msra.mxu0 0.0
    %116 = vmatprep.subr.mxu0 0.0
    %117 = vmatpush1.msra.mxu0 0.0
    %118 = vmatprep.subr.mxu0 0.0
    %119 = vmatpush1.msra.mxu0 0.0
    %120 = vmatprep.subr.mxu0 0.0
    %121 = vmatpush1.msra.mxu0 0.0
    %122 = vmatprep.subr.mxu0 0.0
    %123 = vmatpush1.msra.mxu0 %v82
    %124 = vmatprep.subr.mxu0 0.0
    %125 = vmatpush1.msra.mxu0 %v81
    %126 = vmatprep.subr.mxu0 0.0
    %127 = vmatpush2.msra.mxu0 0.0
    %128 = vmatprep.subr.mxu0 0.0
    %129 = vmatpush2.msra.mxu0 0.0
    %130 = vmatprep.subr.mxu0 0.0
    %131 = vmatpush2.msra.mxu0 0.0
    %132 = vmatprep.subr.mxu0 0.0
    %133 = vmatpush2.msra.mxu0 0.0
    %134 = vmatprep.subr.mxu0 0.0
    %135 = vmatpush2.msra.mxu0 0.0
    %136 = vmatprep.subr.mxu0 0.0
    %137 = vmatpush2.msra.mxu0 0.0
    %138 = vmatprep.subr.mxu0 0.0
    %139 = vmatpush2.msra.mxu0 0.0
    %140 = vmatprep.subr.mxu0 0.0
    %141 = vmatpush2.msra.mxu0 0.0
    %142 = vmatprep.subr.mxu0 0.0
    %143 = vmatpush2.msra.mxu0 0.0
    %144 = vmatprep.subr.mxu0 0.0
    %145 = vmatpush2.msra.mxu0 0.0
    %146 = vmatprep.subr.mxu0 0.0
    %147 = vmatpush2.msra.mxu0 0.0
    %148 = vmatprep.subr.mxu0 0.0
    %149 = vmatpush2.msra.mxu0 0.0
    %150 = vmatprep.subr.mxu0 0.0
    %151 = vmatpush2.msra.mxu0 0.0
    %152 = vmatprep.subr.mxu0 0.0
    %153 = vmatpush2.msra.mxu0 0.0
    %154 = vmatprep.subr.mxu0 0.0
    %155 = vmatpush2.msra.mxu0 0.0
    %156 = vmatprep.subr.mxu0 0.0
    %157 = vmatpush2.msra.mxu0 0.0
    %158 = vmatprep.mubr.f32.mxu0 0.0
    %159 = vmatmul.mubr.f32.gmra.mxu0 %v92
    %v160 = vpop.f32.mrf.mxu0
    %v161 = vadd.f32 %v88, %v160
    %v162 = vpop.f32.mrf.mxu0
    %163 = vdwg.mxu0
    %vm164 = vcmp.gt.f32.partialorder %v161, 0.0
    %v165 = vmul.f32 %v161, 0.01
    %v166 = vsel %vm164, %v161, %v165
    %v167 = vld [vmem:[#allocation7] sm:$0xff]
    %v168 = vld [vmem:[#allocation7 + $0x8] sm:$0xff]
    %v169 = vld [vmem:[#allocation7 + $0x10] sm:$0xff]
    %v170 = vld [vmem:[#allocation7 + $0x18] sm:$0xff]
    %v171 = vld [vmem:[#allocation7 + $0x20] sm:$0xff]
    %v172 = vld [vmem:[#allocation7 + $0x28] sm:$0xff]
    %v173 = vld [vmem:[#allocation7 + $0x30] sm:$0xff]
    %v174 = vld [vmem:[#allocation7 + $0x38] sm:$0xff]
    %v175 = vld [vmem:[#allocation7 + $0x40] sm:$0xff]
    %v176 = vld [vmem:[#allocation7 + $0x48] sm:$0xff]
    %v177 = vld [vmem:[#allocation7 + $0x50] sm:$0xff]
    %v178 = vld [vmem:[#allocation7 + $0x58] sm:$0xff]
    %v179 = vld [vmem:[#allocation7 + $0x60] sm:$0xff]
    %v180 = vld [vmem:[#allocation7 + $0x68] sm:$0xff]
    %v181 = vld [vmem:[#allocation7 + $0x70] sm:$0xff]
    %v182 = vld [vmem:[#allocation7 + $0x78] sm:$0xff]
    %v183 = vld [vmem:[%s4] sm:$0x1]
    %v185 = vlaneseq
    %v186 = vshrl.u32 %v185, 7
    %v187 = vsub.s32 0, %v186
    %v188 = vrot.slane %v183, %v187
    %190 = vmatprep.subr.mxu0 0.0
    %191 = vmatpush1.msra.mxu0 %v182
    %192 = vmatprep.subr.mxu0 0.0
    %193 = vmatpush1.msra.mxu0 %v181
    %194 = vmatprep.subr.mxu0 0.0
    %195 = vmatpush1.msra.mxu0 %v180
    %196 = vmatprep.subr.mxu0 0.0
    %197 = vmatpush1.msra.mxu0 %v179
    %198 = vmatprep.subr.mxu0 0.0
    %199 = vmatpush1.msra.mxu0 %v178
    %200 = vmatprep.subr.mxu0 0.0
    %201 = vmatpush1.msra.mxu0 %v177
    %202 = vmatprep.subr.mxu0 0.0
    %203 = vmatpush1.msra.mxu0 %v176
    %204 = vmatprep.subr.mxu0 0.0
    %205 = vmatpush1.msra.mxu0 %v175
    %206 = vmatprep.subr.mxu0 0.0
    %207 = vmatpush1.msra.mxu0 %v174
    %208 = vmatprep.subr.mxu0 0.0
    %209 = vmatpush1.msra.mxu0 %v173
    %210 = vmatprep.subr.mxu0 0.0
    %211 = vmatpush1.msra.mxu0 %v172
    %212 = vmatprep.subr.mxu0 0.0
    %213 = vmatpush1.msra.mxu0 %v171
    %214 = vmatprep.subr.mxu0 0.0
    %215 = vmatpush1.msra.mxu0 %v170
    %216 = vmatprep.subr.mxu0 0.0
    %217 = vmatpush1.msra.mxu0 %v169
    %218 = vmatprep.subr.mxu0 0.0
    %219 = vmatpush1.msra.mxu0 %v168
    %220 = vmatprep.subr.mxu0 0.0
    %221 = vmatpush1.msra.mxu0 %v167
    %222 = vmatprep.subr.mxu0 0.0
    %223 = vmatpush2.msra.mxu0 0.0
    %224 = vmatprep.subr.mxu0 0.0
    %225 = vmatpush2.msra.mxu0 0.0
    %226 = vmatprep.subr.mxu0 0.0
    %227 = vmatpush2.msra.mxu0 0.0
    %228 = vmatprep.subr.mxu0 0.0
    %229 = vmatpush2.msra.mxu0 0.0
    %230 = vmatprep.subr.mxu0 0.0
    %231 = vmatpush2.msra.mxu0 0.0
    %232 = vmatprep.subr.mxu0 0.0
    %233 = vmatpush2.msra.mxu0 0.0
    %234 = vmatprep.subr.mxu0 0.0
    %235 = vmatpush2.msra.mxu0 0.0
    %236 = vmatprep.subr.mxu0 0.0
    %237 = vmatpush2.msra.mxu0 0.0
    %238 = vmatprep.subr.mxu0 0.0
    %239 = vmatpush2.msra.mxu0 0.0
    %240 = vmatprep.subr.mxu0 0.0
    %241 = vmatpush2.msra.mxu0 0.0
    %242 = vmatprep.subr.mxu0 0.0
    %243 = vmatpush2.msra.mxu0 0.0
    %244 = vmatprep.subr.mxu0 0.0
    %245 = vmatpush2.msra.mxu0 0.0
    %246 = vmatprep.subr.mxu0 0.0
    %247 = vmatpush2.msra.mxu0 0.0
    %248 = vmatprep.subr.mxu0 0.0
    %249 = vmatpush2.msra.mxu0 0.0
    %250 = vmatprep.subr.mxu0 0.0
    %251 = vmatpush2.msra.mxu0 0.0
    %252 = vmatprep.subr.mxu0 0.0
    %253 = vmatpush2.msra.mxu0 0.0
    %254 = vmatprep.mubr.f32.mxu0 0.0
    %255 = vmatmul.mubr.f32.gmra.mxu0 %v166
    %v256 = vpop.f32.mrf.mxu0
    %v257 = vadd.f32 %v188, %v256
    %v258 = vpop.f32.mrf.mxu0
    %259 = vdwg.mxu0
    %vm260 = vcmp.gt.f32.partialorder %v257, 0.0
    %v261 = vmul.f32 %v257, 0.01
    %v262 = vsel %vm260, %v257, %v261
    %v263 = vld [vmem:[#allocation8] sm:$0xff]
    %v264 = vld [vmem:[#allocation8 + $0x8] sm:$0xff]
    %v265 = vld [vmem:[#allocation8 + $0x10] sm:$0xff]
    %v266 = vld [vmem:[#allocation8 + $0x18] sm:$0xff]
    %v267 = vld [vmem:[#allocation8 + $0x20] sm:$0xff]
    %v268 = vld [vmem:[#allocation8 + $0x28] sm:$0xff]
    %v269 = vld [vmem:[#allocation8 + $0x30] sm:$0xff]
    %v270 = vld [vmem:[#allocation8 + $0x38] sm:$0xff]
    %v271 = vld [vmem:[#allocation8 + $0x40] sm:$0xff]
    %v272 = vld [vmem:[#allocation8 + $0x48] sm:$0xff]
    %v273 = vld [vmem:[#allocation8 + $0x50] sm:$0xff]
    %v274 = vld [vmem:[#allocation8 + $0x58] sm:$0xff]
    %v275 = vld [vmem:[#allocation8 + $0x60] sm:$0xff]
    %v276 = vld [vmem:[#allocation8 + $0x68] sm:$0xff]
    %v277 = vld [vmem:[#allocation8 + $0x70] sm:$0xff]
    %v278 = vld [vmem:[#allocation8 + $0x78] sm:$0xff]
    %v279 = vld [vmem:[%s6] sm:$0x1]
    %v281 = vlaneseq
    %v282 = vshrl.u32 %v281, 7
    %v283 = vsub.s32 0, %v282
    %v284 = vrot.slane %v279, %v283
    %286 = vmatprep.subr.mxu0 0.0
    %287 = vmatpush1.msra.mxu0 %v278
    %288 = vmatprep.subr.mxu0 0.0
    %289 = vmatpush1.msra.mxu0 %v277
    %290 = vmatprep.subr.mxu0 0.0
    %291 = vmatpush1.msra.mxu0 %v276
    %292 = vmatprep.subr.mxu0 0.0
    %293 = vmatpush1.msra.mxu0 %v275
    %294 = vmatprep.subr.mxu0 0.0
    %295 = vmatpush1.msra.mxu0 %v274
    %296 = vmatprep.subr.mxu0 0.0
    %297 = vmatpush1.msra.mxu0 %v273
    %298 = vmatprep.subr.mxu0 0.0
    %299 = vmatpush1.msra.mxu0 %v272
    %300 = vmatprep.subr.mxu0 0.0
    %301 = vmatpush1.msra.mxu0 %v271
    %302 = vmatprep.subr.mxu0 0.0
    %303 = vmatpush1.msra.mxu0 %v270
    %304 = vmatprep.subr.mxu0 0.0
    %305 = vmatpush1.msra.mxu0 %v269
    %306 = vmatprep.subr.mxu0 0.0
    %307 = vmatpush1.msra.mxu0 %v268
    %308 = vmatprep.subr.mxu0 0.0
    %309 = vmatpush1.msra.mxu0 %v267
    %310 = vmatprep.subr.mxu0 0.0
    %311 = vmatpush1.msra.mxu0 %v266
    %312 = vmatprep.subr.mxu0 0.0
    %313 = vmatpush1.msra.mxu0 %v265
    %314 = vmatprep.subr.mxu0 0.0
    %315 = vmatpush1.msra.mxu0 %v264
    %316 = vmatprep.subr.mxu0 0.0
    %317 = vmatpush1.msra.mxu0 %v263
    %318 = vmatprep.subr.mxu0 0.0
    %319 = vmatpush2.msra.mxu0 0.0
    %320 = vmatprep.subr.mxu0 0.0
    %321 = vmatpush2.msra.mxu0 0.0
    %322 = vmatprep.subr.mxu0 0.0
    %323 = vmatpush2.msra.mxu0 0.0
    %324 = vmatprep.subr.mxu0 0.0
    %325 = vmatpush2.msra.mxu0 0.0
    %326 = vmatprep.subr.mxu0 0.0
    %327 = vmatpush2.msra.mxu0 0.0
    %328 = vmatprep.subr.mxu0 0.0
    %329 = vmatpush2.msra.mxu0 0.0
    %330 = vmatprep.subr.mxu0 0.0
    %331 = vmatpush2.msra.mxu0 0.0
    %332 = vmatprep.subr.mxu0 0.0
    %333 = vmatpush2.msra.mxu0 0.0
    %334 = vmatprep.subr.mxu0 0.0
    %335 = vmatpush2.msra.mxu0 0.0
    %336 = vmatprep.subr.mxu0 0.0
    %337 = vmatpush2.msra.mxu0 0.0
    %338 = vmatprep.subr.mxu0 0.0
    %339 = vmatpush2.msra.mxu0 0.0
    %340 = vmatprep.subr.mxu0 0.0
    %341 = vmatpush2.msra.mxu0 0.0
    %342 = vmatprep.subr.mxu0 0.0
    %343 = vmatpush2.msra.mxu0 0.0
    %344 = vmatprep.subr.mxu0 0.0
    %345 = vmatpush2.msra.mxu0 0.0
    %346 = vmatprep.subr.mxu0 0.0
    %347 = vmatpush2.msra.mxu0 0.0
    %348 = vmatprep.subr.mxu0 0.0
    %349 = vmatpush2.msra.mxu0 0.0
    %350 = vmatprep.mubr.f32.mxu0 0.0
    %351 = vmatmul.mubr.f32.gmra.mxu0 %v262
    %v352 = vpop.f32.mrf.mxu0
    %v353 = vadd.f32 %v284, %v352
    %v354 = vpop.f32.mrf.mxu0
    %355 = vdwg.mxu0
    %356 = vmax.xlane.f32.xlu0 %v353
    %v357 = vpop.xlane.xlu0 %356
    %v358 = vsub.f32 %v353, %v357
    %v359 = vmul.f32 %v358, 1.442695
    %v360 = vpow.pop %v359
    %361 = vadd.xlane.f32.xlu0 %v360
    %v362 = vpop.xlane.xlu0 %361
    %v363 = vrcp.pop %v362
    %v364 = vmul.f32 %v362, %v363
    %v365 = vsub.f32 2.0, %v364
    %v366 = vmul.f32 %v363, %v365
    %v367 = vmul.f32 %v360, %v366
    %368 = vst [vmem:[#allocation10] sm:$0xff] %v367
    // Predicated region
    $region46: #{actor_forward.1} parent=1 // pred_check
      _
    $region47: #{actor_forward.1} parent=1 // pred_check_branch
      %370 = sbr.rel (0) target = $region49
    $region48: #{actor_forward.1} parent=1 // pred_region
      %s372 = ssub.s32 128, 128
      %373 = vsyncadd [#allocation4], %s372
      %s375 = sshll.u32 [#allocation10], 4
      %s376 = int_to_ptr.vmem [resolvable:$true] %s375
      %378 = dma.vmem_to_hbm [thread:$0]  %s376, 128, %s7, [#allocation4]
    $region49: #{actor_forward.1} parent=1 // pred_fallthru
      _
    // Predicated region
    $region50: #{actor_forward.1} parent=1 // pred_check
      _
    $region51: #{actor_forward.1} parent=1 // pred_check_branch
      %380 = sbr.rel (0) target = $region53
    $region52: #{actor_forward.1} parent=1 // pred_region
      %381 = dma.done [#allocation4], 128
    $region53: #{actor_forward.1} parent=1 // pred_fallthru
      _
    %382 = vsyncpa [#allocation3], 1
    %383 = vsyncpa [#allocation6], 1
    %384 = vsyncpa [#allocation9], 1
    %385 = vsyncpa [#allocation4], 1

</llo_original>
